<compile_context>
chip_gen: v5e
topology: v5e:2x2
jax: 0.10.0
libtpu: 0.0.40
codegen_flags: <defaults>
</compile_context>

<pallas_src>
import functools

import jax
import jax.numpy as jnp
from jax.experimental import pallas as pl
from jax.experimental.pallas import tpu as pltpu


def _round_up(x, m):
    return ((x + m - 1) // m) * m


def _vmem_cap_bytes():
    """~75% of physical VMEM: leaves headroom for Mosaic scratch/semaphores."""
    try:
        info = pltpu.get_tpu_info()
        cap = int(getattr(info, "vmem_capacity_bytes"))
    except Exception:
        cap = 64 * 1024 * 1024  # conservative fallback: v7x physical VMEM
    return max(int(0.75 * cap), 32 * 1024 * 1024)


def mlp_kernel(x_ref, w1_ref, b1_ref, w2_ref, b2_ref, o_ref):
    # Cast the streamed activations to the MXU dtype on the VPU (x stays
    # unpadded/un-copied in HBM).
    x = x_ref[...].astype(w1_ref.dtype)
    # fc1: [tb, in](bf16) @ [in, hid_p](bf16) -> f32 accumulation on the MXU.
    h = jnp.dot(x, w1_ref[...], preferred_element_type=jnp.float32)
    # Bias-add + ReLU in f32 (VPU).
    h = jnp.maximum(h + b1_ref[...], 0.0)
    # fc2: activations back to bf16 for the MXU, accumulate in f32.
    y = jnp.dot(h.astype(w2_ref.dtype), w2_ref[...],
                preferred_element_type=jnp.float32)
    # bf16, lane-dense (128-padded) output store.
    o_ref[...] = (y + b2_ref[...]).astype(o_ref.dtype)


def prepare_simple_nn_params(w1, b1, w2, b2, compute_dtype=jnp.bfloat16):
    """One-time (hoisted) padding + cast of the SimpleNN parameters.

    w1: [in, hidden], b1: [hidden], w2: [hidden, out], b2: [out]
    (weights pre-transposed vs. PyTorch's [out, in] layout).
    Returns ((w1p, b1p, w2p, b2p), out_size).
    """
    in_size, hidden = w1.shape
    out_size = w2.shape[1]
    hid_p = _round_up(hidden, 128)
    out_p = _round_up(out_size, 128)
    # Zero-padding is exact for linear layers + ReLU (padded rows/cols are 0).
    w1p = jnp.zeros((in_size, hid_p), compute_dtype).at[:, :hidden].set(
        w1.astype(compute_dtype))
    b1p = jnp.zeros((1, hid_p), jnp.float32).at[0, :hidden].set(
        b1.astype(jnp.float32))
    w2p = jnp.zeros((hid_p, out_p), compute_dtype).at[:hidden, :out_size].set(
        w2.astype(compute_dtype))
    b2p = jnp.zeros((1, out_p), jnp.float32).at[0, :out_size].set(
        b2.astype(jnp.float32))
    return (w1p, b1p, w2p, b2p), out_size


@functools.partial(jax.jit, static_argnames=("out_size", "block_b", "out_dtype"))
def simple_nn_forward(x, w1p, b1p, w2p, b2p, *, out_size, block_b=None,
                      out_dtype=jnp.bfloat16):
    """x: [B, in]; padded params from prepare_simple_nn_params -> [B, out]."""
    B, in_size = x.shape
    assert w1p.shape[0] == in_size
    hid_p = w1p.shape[1]
    out_p = w2p.shape[1]
    compute_dtype = w1p.dtype

    # Batch tile: large (HBM-bound kernel), multiple of 256 rows to fill the
    # MXU M dim, and chosen so large B yields >= 2 grid steps (v7x megacore).
    if block_b is None:
        if B <= 512:
            block_b = B                     # single full-dim tile (exempt from 8-row rule)
        else:
            block_b = min(1024, _round_up(pl.cdiv(B, 2), 256))
    else:
        block_b = max(1, min(int(block_b), B))
        if block_b < B:
            block_b = min(_round_up(block_b, 8), B)
    grid = (pl.cdiv(B, block_b),)           # trailing partial block is clipped on write

    cbytes = jnp.dtype(compute_dtype).itemsize
    xbytes = jnp.dtype(x.dtype).itemsize
    obytes = jnp.dtype(out_dtype).itemsize

    # VMEM need: double-buffered x/out tiles, default-double-buffered resident
    # weights/biases, plus in-kernel f32 activations and dtype-cast copies.
    vmem_need = (
        2 * block_b * in_size * xbytes                       # x tile (dbl buf)
        + 2 * block_b * out_p * obytes                       # out tile (dbl buf)
        + 2 * (in_size * hid_p + hid_p * out_p) * cbytes     # weights (dbl buf)
        + 2 * (hid_p + out_p) * 4                            # f32 biases (dbl buf)
        + block_b * (in_size + hid_p) * cbytes               # bf16 copies of x, h
        + block_b * (hid_p + out_p) * 4                      # f32 h and pre-cast y
    )
    vmem_limit = int(min(max(2 * vmem_need, 32 * 1024 * 1024), _vmem_cap_bytes()))
    # TODO(synk): if hidden/out grow to several K, add pipeline_mode=pl.Buffered(1)
    # on the resident weight specs (halves their VMEM) and, past VMEM capacity,
    # a K-grid reduction axis with a VMEM f32 accumulator.

    cost = pl.CostEstimate(
        flops=2 * B * in_size * hid_p + 2 * B * hid_p * out_p,
        transcendentals=0,
        bytes_accessed=(x.size * xbytes
                        + (w1p.size + w2p.size) * cbytes
                        + (b1p.size + b2p.size) * 4
                        + B * out_p * obytes),
    )

    out_padded = pl.pallas_call(
        mlp_kernel,
        out_shape=jax.ShapeDtypeStruct((B, out_p), out_dtype),
        grid_spec=pltpu.PrefetchScalarGridSpec(
            num_scalar_prefetch=0,
            grid=grid,
            in_specs=[
                pl.BlockSpec((block_b, in_size), lambda i: (i, 0)),  # x tile (unpadded)
                pl.BlockSpec((in_size, hid_p), lambda i: (0, 0)),    # w1 (resident)
                pl.BlockSpec((1, hid_p), lambda i: (0, 0)),          # b1
                pl.BlockSpec((hid_p, out_p), lambda i: (0, 0)),      # w2 (resident)
                pl.BlockSpec((1, out_p), lambda i: (0, 0)),          # b2
            ],
            out_specs=pl.BlockSpec((block_b, out_p), lambda i: (i, 0)),
        ),
        compiler_params=pltpu.CompilerParams(
            dimension_semantics=("parallel",),
            vmem_limit_bytes=vmem_limit,
        ),
        cost_estimate=cost,
    )(x, w1p, b1p, w2p, b2p)

    # Slice the zero-padded output lanes back off (batch was never padded).
    return out_padded[:, :out_size]


if __name__ == "__main__":
    # Small shapes consistent with the SimpleNN forward.
    batch = 8
    input_size = 32
    hidden_size = 64
    output_size = 16

    key = jax.random.PRNGKey(0)
    kx, kw1, kb1, kw2, kb2, kx2 = jax.random.split(key, 6)

    x = jax.random.normal(kx, (batch, input_size), dtype=jnp.float32)

    # PyTorch nn.Linear default init: U(-1/sqrt(fan_in), 1/sqrt(fan_in)).
    lim1 = 1.0 / (input_size ** 0.5)
    lim2 = 1.0 / (hidden_size ** 0.5)
    # Stored pre-transposed as [in, out] (PyTorch stores [out, in], does x @ W.T).
    w1 = jax.random.uniform(kw1, (input_size, hidden_size), jnp.float32, -lim1, lim1)
    b1 = jax.random.uniform(kb1, (hidden_size,), jnp.float32, -lim1, lim1)
    w2 = jax.random.uniform(kw2, (hidden_size, output_size), jnp.float32, -lim2, lim2)
    b2 = jax.random.uniform(kb2, (output_size,), jnp.float32, -lim2, lim2)

    # One-time parameter prep (padding/cast hoisted out of the forward path).
    params, out_size = prepare_simple_nn_params(w1, b1, w2, b2)

    out = simple_nn_forward(x, *params, out_size=out_size)
    jax.block_until_ready(out)
    assert out.shape == (batch, output_size)
    out_f32 = out.astype(jnp.float32)

    f32 = jnp.float32

    def ref_bf16_recipe(xi):
        # Same bf16-operand / f32-accumulate recipe as the kernel (output kept f32).
        xb = xi.astype(jnp.bfloat16).astype(f32)
        w1b = w1.astype(jnp.bfloat16).astype(f32)
        w2b = w2.astype(jnp.bfloat16).astype(f32)
        hb = jnp.maximum(xb @ w1b + b1, 0.0).astype(jnp.bfloat16).astype(f32)
        return hb @ w2b + b2

    # Reference 1: bf16 recipe (only difference is the final bf16 output rounding).
    assert jnp.allclose(out_f32, ref_bf16_recipe(x), atol=2e-2, rtol=2e-2)

    # Reference 2: full f32 math (loose tolerance accounts for bf16 operands/output).
    ref_f32 = jnp.maximum(x @ w1 + b1, 0.0) @ w2 + b2
    assert jnp.allclose(out_f32, ref_f32, atol=5e-2, rtol=5e-2)

    # Ragged / multi-step-grid batch: B=600 -> block_b=512, grid=(2,), trailing
    # partial block with 88 valid rows (exercises Pallas write clipping).
    x_big = jax.random.normal(kx2, (600, input_size), dtype=jnp.float32)
    out_big = simple_nn_forward(x_big, *params, out_size=out_size)
    jax.block_until_ready(out_big)
    assert out_big.shape == (600, output_size)
    assert jnp.allclose(out_big.astype(f32), ref_bf16_recipe(x_big),
                        atol=2e-2, rtol=2e-2)

    print("KERNEL_OK")
</pallas_src>

<mosaic_0001>
module attributes {stable_mosaic.version = 11 : i64} {
  func.func @mlp_kernel(%arg0: i32, %arg1: memref<8x32xf32, #tpu.memory_space<vmem>>, %arg2: memref<32x128xbf16, #tpu.memory_space<vmem>>, %arg3: memref<1x128xf32, #tpu.memory_space<vmem>>, %arg4: memref<128x128xbf16, #tpu.memory_space<vmem>>, %arg5: memref<1x128xf32, #tpu.memory_space<vmem>>, %arg6: memref<8x128xbf16, #tpu.memory_space<vmem>>) attributes {dimension_semantics = [#tpu.dimension_semantics<parallel>], iteration_bounds = array<i64: 1>, scalar_prefetch = 0 : i64, scratch_operands = 0 : i64, tpu.core_type = #tpu.core_type<tc>, window_params = [{transform_indices = @transform_0, window_bounds = array<i64: 8, 32>}, {pipeline_mode = #tpu.pipeline_mode<synchronous>, transform_indices = @transform_1, window_bounds = array<i64: 32, 128>}, {pipeline_mode = #tpu.pipeline_mode<synchronous>, transform_indices = @transform_2, window_bounds = array<i64: 1, 128>}, {pipeline_mode = #tpu.pipeline_mode<synchronous>, transform_indices = @transform_3, window_bounds = array<i64: 128, 128>}, {pipeline_mode = #tpu.pipeline_mode<synchronous>, transform_indices = @transform_4, window_bounds = array<i64: 1, 128>}, {transform_indices = @transform_5, window_bounds = array<i64: 8, 128>}]} {
    %c0 = arith.constant 0 : index
    %c0_0 = arith.constant 0 : index
    %0 = vector.load %arg1[%c0, %c0_0] : memref<8x32xf32, #tpu.memory_space<vmem>>, vector<8x32xf32>
    %1 = arith.truncf %0 : vector<8x32xf32> to vector<8x32xbf16>
    %c0_1 = arith.constant 0 : index
    %c0_2 = arith.constant 0 : index
    %2 = vector.load %arg2[%c0_1, %c0_2] : memref<32x128xbf16, #tpu.memory_space<vmem>>, vector<32x128xbf16>
    %cst = arith.constant dense<0.000000e+00> : vector<8x128xf32>
    %3 = tpu.matmul %1, %2, %cst {dimension_numbers = #tpu.dot_dimension_numbers<[1], [0], [0], [1], [0, 0, 1, 1], [], []>} : vector<8x32xbf16>, vector<32x128xbf16>, vector<8x128xf32> -> vector<8x128xf32>
    %c0_3 = arith.constant 0 : index
    %c0_4 = arith.constant 0 : index
    %4 = vector.load %arg3[%c0_3, %c0_4] : memref<1x128xf32, #tpu.memory_space<vmem>>, vector<1x128xf32>
    %5 = vector.broadcast %4 : vector<1x128xf32> to vector<8x128xf32>
    %6 = arith.addf %3, %5 : vector<8x128xf32>
    %cst_5 = arith.constant 0.000000e+00 : f32
    %7 = vector.broadcast %cst_5 : f32 to vector<8x128xf32>
    %8 = arith.maximumf %6, %7 : vector<8x128xf32>
    %9 = arith.truncf %8 : vector<8x128xf32> to vector<8x128xbf16>
    %c0_6 = arith.constant 0 : index
    %c0_7 = arith.constant 0 : index
    %10 = vector.load %arg4[%c0_6, %c0_7] : memref<128x128xbf16, #tpu.memory_space<vmem>>, vector<128x128xbf16>
    %cst_8 = arith.constant dense<0.000000e+00> : vector<8x128xf32>
    %11 = tpu.matmul %9, %10, %cst_8 {dimension_numbers = #tpu.dot_dimension_numbers<[1], [0], [0], [1], [0, 0, 1, 1], [], []>} : vector<8x128xbf16>, vector<128x128xbf16>, vector<8x128xf32> -> vector<8x128xf32>
    %c0_9 = arith.constant 0 : index
    %c0_10 = arith.constant 0 : index
    %12 = vector.load %arg5[%c0_9, %c0_10] : memref<1x128xf32, #tpu.memory_space<vmem>>, vector<1x128xf32>
    %13 = vector.broadcast %12 : vector<1x128xf32> to vector<8x128xf32>
    %14 = arith.addf %11, %13 : vector<8x128xf32>
    %15 = arith.truncf %14 : vector<8x128xf32> to vector<8x128xbf16>
    %c0_11 = arith.constant 0 : index
    %c0_12 = arith.constant 0 : index
    %16 = vector.load %arg6[%c0_11, %c0_12] : memref<8x128xbf16, #tpu.memory_space<vmem>>, vector<8x128xbf16>
    tpu.vector_store %arg6[%c0_11, %c0_12], %15 {strides = array<i32>} : memref<8x128xbf16, #tpu.memory_space<vmem>>, vector<8x128xbf16>,
    return
  }
  func.func @transform_0(%arg0: i32) -> (i32, i32) {
    %c0_i32 = arith.constant 0 : i32
    %c0_i32_0 = arith.constant 0 : i32
    return %arg0, %c0_i32 : i32, i32
  }
  func.func @transform_1(%arg0: i32) -> (i32, i32) {
    %c0_i32 = arith.constant 0 : i32
    %c0_i32_0 = arith.constant 0 : i32
    %c0_i32_1 = arith.constant 0 : i32
    return %c0_i32, %c0_i32_0 : i32, i32
  }
  func.func @transform_2(%arg0: i32) -> (i32, i32) {
    %c0_i32 = arith.constant 0 : i32
    %c0_i32_0 = arith.constant 0 : i32
    %c0_i32_1 = arith.constant 0 : i32
    return %c0_i32, %c0_i32_0 : i32, i32
  }
  func.func @transform_3(%arg0: i32) -> (i32, i32) {
    %c0_i32 = arith.constant 0 : i32
    %c0_i32_0 = arith.constant 0 : i32
    %c0_i32_1 = arith.constant 0 : i32
    return %c0_i32, %c0_i32_0 : i32, i32
  }
  func.func @transform_4(%arg0: i32) -> (i32, i32) {
    %c0_i32 = arith.constant 0 : i32
    %c0_i32_0 = arith.constant 0 : i32
    %c0_i32_1 = arith.constant 0 : i32
    return %c0_i32, %c0_i32_0 : i32, i32
  }
  func.func @transform_5(%arg0: i32) -> (i32, i32) {
    %c0_i32 = arith.constant 0 : i32
    %c0_i32_0 = arith.constant 0 : i32
    return %arg0, %c0_i32 : i32, i32
  }
}

</mosaic_0001>

<llo_original>
// kernel: simple_nn_forward.1
$region0: #{simple_nn_forward.1}
  #allocation0 [shape = 'u32[]', space=smem, size = 0x4, offset = 0x4, fixed_abs, tag = 'smem constant byte address 0x4 - core index']
  #allocation1 [shape = 'u32[72,128]{1,0:T(1,128)}', space=vmem, size = 0x9000, scoped, tag = 'internal scratch']
  %s0 = inlined_call_operand.hbm [shape: f32[8,32], index: 0, kind: input, shape index: {}]
  %s1 = inlined_call_operand.hbm [shape: bf16[32,128], index: 1, kind: input, shape index: {}]
  %s2 = inlined_call_operand.vmem [shape: f32[1,128], index: 2, kind: input, shape index: {}]
  %s3 = inlined_call_operand.hbm [shape: bf16[128,128], index: 3, kind: input, shape index: {}]
  %s4 = inlined_call_operand.vmem [shape: f32[1,128], index: 4, kind: input, shape index: {}]
  %s5 = inlined_call_operand.hbm [shape: bf16[8,128], index: 5, kind: output, shape index: {}]
  %s6 = sld [smem:[#allocation0]]
  $region42: #{simple_nn_forward.1} parent=0
    _
  %s8 = ssub.s32 1, %s6
  %s9 = scalar_select 0, %s8, %s6
  $region1: #{simple_nn_forward.1} parent=0
    #allocation2 [shape = 'u8[4096]{0}', space=vmem, size = 0x1000, scoped, tag = 'input window, operand 0, single buffered']
    #allocation3 [shape = 's32[1]{0}', space=sflag, size = 0x4, scoped, tag = 'scoped memory for simple_nn_forward.1']
    #allocation4 [shape = 's32[1]{0}', space=sflag, size = 0x4, scoped, tag = 'scoped memory for simple_nn_forward.1']
    #allocation5 [shape = 'u8[8192]{0}', space=vmem, size = 0x2000, scoped, tag = 'input window, operand 1, single buffered']
    #allocation6 [shape = 's32[1]{0}', space=sflag, size = 0x4, scoped, tag = 'scoped memory for simple_nn_forward.1']
    #allocation7 [shape = 'u8[32768]{0}', space=vmem, size = 0x8000, scoped, tag = 'input window, operand 3, single buffered']
    #allocation8 [shape = 'u8[2048]{0}', space=vmem, size = 0x800, scoped, tag = 'output window, operand 0, single buffered']
    %10 = vsyncpa [#allocation3], 0
    %11 = vsyncpa [#allocation6], 0
    %12 = vsyncpa [#allocation4], 0
    // Predicated region
    $region2: #{simple_nn_forward.1} parent=1 // pred_check
      _
    $region3: #{simple_nn_forward.1} parent=1 // pred_check_branch
      %14 = sbr.rel (0) target = $region5
    $region4: #{simple_nn_forward.1} parent=1 // pred_region
      %16 = vsyncadd [#allocation3], 0
      %s18 = sshll.u32 %s0, 4
      %s19 = int_to_ptr.hbm [resolvable:$true] %s18
      %s20 = sshll.u32 [#allocation2], 4
      %s21 = int_to_ptr.vmem [resolvable:$true] %s20
      %23 = dma.hbm_to_vmem [thread:$0]  %s19, 128, %s21, [#allocation3]
    $region5: #{simple_nn_forward.1} parent=1 // pred_fallthru
      _
    // Predicated region
    $region6: #{simple_nn_forward.1} parent=1 // pred_check
      _
    $region7: #{simple_nn_forward.1} parent=1 // pred_check_branch
      %25 = sbr.rel (0) target = $region9
    $region8: #{simple_nn_forward.1} parent=1 // pred_region
      %27 = vsyncadd [#allocation6], 0
      %s28 = sshll.u32 %s1, 4
      %s29 = int_to_ptr.hbm [resolvable:$true] %s28
      %s30 = sshll.u32 [#allocation5], 4
      %s31 = int_to_ptr.vmem [resolvable:$true] %s30
      %36 = dma.hbm_to_vmem [thread:$0]  %s29, 256, %s31, [#allocation6], 64, 64, 4
    $region9: #{simple_nn_forward.1} parent=1 // pred_fallthru
      _
    // Predicated region
    $region10: #{simple_nn_forward.1} parent=1 // pred_check
      _
    $region11: #{simple_nn_forward.1} parent=1 // pred_check_branch
      %38 = sbr.rel (0) target = $region13
    $region12: #{simple_nn_forward.1} parent=1 // pred_region
      _
    $region13: #{simple_nn_forward.1} parent=1 // pred_fallthru
      _
    // Predicated region
    $region14: #{simple_nn_forward.1} parent=1 // pred_check
      _
    $region15: #{simple_nn_forward.1} parent=1 // pred_check_branch
      %40 = sbr.rel (0) target = $region17
    $region16: #{simple_nn_forward.1} parent=1 // pred_region
      %42 = vsyncadd [#allocation6], 0
      %s43 = sshll.u32 %s3, 4
      %s44 = int_to_ptr.hbm [resolvable:$true] %s43
      %s45 = sshll.u32 [#allocation7], 4
      %s46 = int_to_ptr.vmem [resolvable:$true] %s45
      %51 = dma.hbm_to_vmem [thread:$0]  %s44, 1024, %s46, [#allocation6], 64, 64, 4
    $region17: #{simple_nn_forward.1} parent=1 // pred_fallthru
      _
    // Predicated region
    $region18: #{simple_nn_forward.1} parent=1 // pred_check
      _
    $region19: #{simple_nn_forward.1} parent=1 // pred_check_branch
      %53 = sbr.rel (0) target = $region21
    $region20: #{simple_nn_forward.1} parent=1 // pred_region
      _
    $region21: #{simple_nn_forward.1} parent=1 // pred_fallthru
      _
    // Predicated region
    $region22: #{simple_nn_forward.1} parent=1 // pred_check
      _
    $region23: #{simple_nn_forward.1} parent=1 // pred_check_branch
      %55 = sbr.rel (0) target = $region25
    $region24: #{simple_nn_forward.1} parent=1 // pred_region
      %57 = dma.done [#allocation3], 128
    $region25: #{simple_nn_forward.1} parent=1 // pred_fallthru
      _
    // Predicated region
    $region26: #{simple_nn_forward.1} parent=1 // pred_check
      _
    $region27: #{simple_nn_forward.1} parent=1 // pred_check_branch
      %59 = sbr.rel (0) target = $region29
    $region28: #{simple_nn_forward.1} parent=1 // pred_region
      %61 = dma.done [#allocation6], 256
    $region29: #{simple_nn_forward.1} parent=1 // pred_fallthru
      _
    // Predicated region
    $region30: #{simple_nn_forward.1} parent=1 // pred_check
      _
    $region31: #{simple_nn_forward.1} parent=1 // pred_check_branch
      %63 = sbr.rel (0) target = $region33
    $region32: #{simple_nn_forward.1} parent=1 // pred_region
      %65 = dma.done [#allocation6], 1024
    $region33: #{simple_nn_forward.1} parent=1 // pred_fallthru
      _
    %v67 = vld [vmem:[#allocation2] sm:$0xff]
    %v68 = vpack.c.bf16 %v67, %v67
    %v69 = vld [vmem:[#allocation5] sm:$0xf]
    %v70 = vld [vmem:[#allocation5 + $0x4] sm:$0xf]
    %v71 = vld [vmem:[#allocation5 + $0x8] sm:$0xf]
    %v72 = vld [vmem:[#allocation5 + $0xc] sm:$0xf]
    %v73 = vld [vmem:[%s2] sm:$0x1]
    %v75 = vperm.slane %v73, 0
    %v81 = vunpack.c.l.b16 %v69
    %v82 = vunpack.c.l.b16 %v70
    %v83 = vunpack.c.l.b16 %v71
    %v84 = vunpack.c.l.b16 %v72
    %v85 = vpack.c.b16 %v82, %v81
    %v86 = vpack.c.b16 %v84, %v83
    %vm89 = vcmask 261120
    %v91 = vsel %vm89, %v68, 0
    %93 = vmatpush.bf16.msra.mxu0 0
    %94 = vmatpush.bf16.msra.mxu0 0
    %95 = vmatpush.bf16.msra.mxu0 0
    %96 = vmatpush.bf16.msra.mxu0 0
    %97 = vmatpush.bf16.msra.mxu0 0
    %98 = vmatpush.bf16.msra.mxu0 0
    %99 = vmatpush.bf16.msra.mxu0 %v86
    %100 = vmatpush.bf16.msra.mxu0 %v85
    %101 = vmatmul.bf16.gmra.mxu0 %v91
    %v102 = vpop.f32.mrf.mxu0
    %v103 = vadd.f32 %v75, %v102
    %v104 = vpop.f32.mrf.mxu0
    %105 = vdwg.mxu0
    %v106 = vmax.f32 %v103, 0.0
    %v107 = vpack.c.bf16 %v106, %v106
    %v108 = vld [vmem:[#allocation7] sm:$0xf]
    %v109 = vld [vmem:[#allocation7 + $0x4] sm:$0xf]
    %v110 = vld [vmem:[#allocation7 + $0x8] sm:$0xf]
    %v111 = vld [vmem:[#allocation7 + $0xc] sm:$0xf]
    %v112 = vld [vmem:[#allocation7 + $0x10] sm:$0xf]
    %v113 = vld [vmem:[#allocation7 + $0x14] sm:$0xf]
    %v114 = vld [vmem:[#allocation7 + $0x18] sm:$0xf]
    %v115 = vld [vmem:[#allocation7 + $0x1c] sm:$0xf]
    %v116 = vld [vmem:[#allocation7 + $0x20] sm:$0xf]
    %v117 = vld [vmem:[#allocation7 + $0x24] sm:$0xf]
    %v118 = vld [vmem:[#allocation7 + $0x28] sm:$0xf]
    %v119 = vld [vmem:[#allocation7 + $0x2c] sm:$0xf]
    %v120 = vld [vmem:[#allocation7 + $0x30] sm:$0xf]
    %v121 = vld [vmem:[#allocation7 + $0x34] sm:$0xf]
    %v122 = vld [vmem:[#allocation7 + $0x38] sm:$0xf]
    %v123 = vld [vmem:[#allocation7 + $0x3c] sm:$0xf]
    %v124 = vld [vmem:[%s4] sm:$0x1]
    %v126 = vperm.slane %v124, 0
    %v144 = vunpack.c.l.b16 %v108
    %v145 = vunpack.c.l.b16 %v109
    %v146 = vunpack.c.l.b16 %v110
    %v147 = vunpack.c.l.b16 %v111
    %v148 = vunpack.c.l.b16 %v112
    %v149 = vunpack.c.l.b16 %v113
    %v150 = vunpack.c.l.b16 %v114
    %v151 = vunpack.c.l.b16 %v115
    %v152 = vunpack.c.l.b16 %v116
    %v153 = vunpack.c.l.b16 %v117
    %v154 = vunpack.c.l.b16 %v118
    %v155 = vunpack.c.l.b16 %v119
    %v156 = vunpack.c.l.b16 %v120
    %v157 = vunpack.c.l.b16 %v121
    %v158 = vunpack.c.l.b16 %v122
    %v159 = vunpack.c.l.b16 %v123
    %v160 = vpack.c.b16 %v145, %v144
    %v161 = vpack.c.b16 %v147, %v146
    %v162 = vpack.c.b16 %v149, %v148
    %v163 = vpack.c.b16 %v151, %v150
    %v164 = vpack.c.b16 %v153, %v152
    %v165 = vpack.c.b16 %v155, %v154
    %v166 = vpack.c.b16 %v157, %v156
    %v167 = vpack.c.b16 %v159, %v158
    %176 = vmatpush.bf16.msra.mxu0 %v167
    %177 = vmatpush.bf16.msra.mxu0 %v166
    %178 = vmatpush.bf16.msra.mxu0 %v165
    %179 = vmatpush.bf16.msra.mxu0 %v164
    %180 = vmatpush.bf16.msra.mxu0 %v163
    %181 = vmatpush.bf16.msra.mxu0 %v162
    %182 = vmatpush.bf16.msra.mxu0 %v161
    %183 = vmatpush.bf16.msra.mxu0 %v160
    %184 = vmatmul.bf16.gmra.mxu0 %v107
    %v185 = vpop.f32.mrf.mxu0
    %v186 = vadd.f32 %v126, %v185
    %v187 = vpop.f32.mrf.mxu0
    %188 = vdwg.mxu0
    %v189 = vpack.c.bf16 %v186, %v186
    %190 = vst [vmem:[#allocation8] sm:$0xf] %v189
    // Predicated region
    $region34: #{simple_nn_forward.1} parent=1 // pred_check
      _
    $region35: #{simple_nn_forward.1} parent=1 // pred_check_branch
      %192 = sbr.rel (0) target = $region37
    $region36: #{simple_nn_forward.1} parent=1 // pred_region
      %194 = vsyncadd [#allocation4], 0
      %s196 = sshll.u32 [#allocation8], 4
      %s197 = int_to_ptr.vmem [resolvable:$true] %s196
      %s198 = sshll.u32 %s5, 4
      %s199 = int_to_ptr.hbm [resolvable:$true] %s198
      %201 = dma.vmem_to_hbm [thread:$0]  %s197, 64, %s199, [#allocation4]
    $region37: #{simple_nn_forward.1} parent=1 // pred_fallthru
      _
    // Predicated region
    $region38: #{simple_nn_forward.1} parent=1 // pred_check
      _
    $region39: #{simple_nn_forward.1} parent=1 // pred_check_branch
      %203 = sbr.rel (0) target = $region41
    $region40: #{simple_nn_forward.1} parent=1 // pred_region
      %205 = dma.done [#allocation4], 64
    $region41: #{simple_nn_forward.1} parent=1 // pred_fallthru
      _
    %206 = vsyncpa [#allocation3], 1
    %207 = vsyncpa [#allocation6], 1
    %208 = vsyncpa [#allocation4], 1

</llo_original>
